<compile_context>
chip_gen: v6e
topology: v6e:2x2x1
jax: 0.10.0
libtpu: 0.0.40
codegen_flags: <defaults>
</compile_context>

<pallas_src>
import functools

import jax
import jax.numpy as jnp
from jax.experimental import pallas as pl
from jax.experimental.pallas import tpu as pltpu

LRELU_SLOPE = 0.2
BN_EPS = 1e-5

N_PAD = 128   # fused head output lanes: [logits | mu | var | zero padding]
C_PAD = 128   # backbone output channels padded to one full vreg lane width


def _leaky_relu(x):
    return jnp.where(x >= 0, x, LRELU_SLOPE * x)


def qback_kernel(patches_ref, w1_ref, g1_ref, b1_ref,
                 wh_ref, gh_ref, bh_ref, out_ref,
                 *, m_real, dim_disc, dim_cont):
    m_pad, n_pad = out_ref.shape
    inv_m = 1.0 / m_real

    # Rows >= m_real are zero padding (keeps sublanes full); exclude them from BN stats.
    row = jax.lax.broadcasted_iota(jnp.int32, (m_pad, 1), 0)
    rowmask = (row < m_real).astype(jnp.float32)

    def bn_lrelu(h, gamma, beta):
        # Training-mode BatchNorm (biased variance) over the real rows, with the affine
        # folded into a single FMA:  y = h * s + t,  s = gamma*rsqrt(var+eps),
        # t = beta - mean*s.  Two-pass variance keeps it numerically safe.
        mean = jnp.sum(h * rowmask, axis=0, keepdims=True) * inv_m
        diff = (h - mean) * rowmask
        var = jnp.sum(diff * diff, axis=0, keepdims=True) * inv_m
        s = gamma * jax.lax.rsqrt(var + BN_EPS)
        t = beta - mean * s
        y = h * s + t
        return jnp.where(y >= 0, y, LRELU_SLOPE * y)

    # Backbone conv as an im2col matmul (bf16 operands, f32 accumulation) + BN + LReLU.
    x = jnp.dot(patches_ref[...], w1_ref[...], preferred_element_type=jnp.float32)
    x = bn_lrelu(x, g1_ref[...], b1_ref[...]) * rowmask   # zero the padded rows

    # All three 1x1-conv heads fused into ONE lane-dense matmul: [logits | mu | var | pad].
    h = jnp.dot(x.astype(jnp.bfloat16), wh_ref[...],
                preferred_element_type=jnp.float32)
    d = bn_lrelu(h, gh_ref[...], bh_ref[...])   # BN + LeakyReLU (used for logit lanes)

    # Per-lane post-processing select: logits lanes -> BN+LReLU, mu lanes -> identity,
    # var lanes (and padding) -> exp.  One unmasked (m_pad, 128) store.
    col = jax.lax.broadcasted_iota(jnp.int32, (1, n_pad), 1)
    is_logit = col < dim_disc
    is_mu = (col >= dim_disc) & (col < dim_disc + dim_cont)
    out_ref[...] = jnp.where(is_logit, d, jnp.where(is_mu, h, jnp.exp(h)))


def prepare_params(params):
    """One-time layout prep (keep OUT of the per-call hot path).

    PyTorch OIHW weights -> lane-padded matmul operands: bf16 weight matrices for the MXU
    and f32 BN affine rows, all padded to 128 lanes so matmuls / stores are lane-dense.
    """
    w1, g1, b1, wd, gd, bd, wmu, wvar = params
    c_out1, c_in, kh, kw = w1.shape
    kdim = c_in * kh * kw
    dim_disc, dim_cont = wd.shape[0], wmu.shape[0]
    n_heads = dim_disc + 2 * dim_cont
    assert c_out1 <= C_PAD and n_heads <= N_PAD

    w1_m = jnp.zeros((kdim, C_PAD), jnp.float32)
    w1_m = w1_m.at[:, :c_out1].set(w1.reshape(c_out1, kdim).T)
    g1_m = jnp.ones((1, C_PAD), jnp.float32).at[0, :c_out1].set(g1)
    b1_m = jnp.zeros((1, C_PAD), jnp.float32).at[0, :c_out1].set(b1)

    # Fused head weights [logits | mu | var], zero-padded to (C_PAD, N_PAD).
    wh = jnp.concatenate([wd.reshape(dim_disc, c_out1),
                          wmu.reshape(dim_cont, c_out1),
                          wvar.reshape(dim_cont, c_out1)], axis=0).T
    wh_m = jnp.zeros((C_PAD, N_PAD), jnp.float32).at[:c_out1, :n_heads].set(wh)
    gh_m = jnp.ones((1, N_PAD), jnp.float32).at[0, :dim_disc].set(gd)
    bh_m = jnp.zeros((1, N_PAD), jnp.float32).at[0, :dim_disc].set(bd)

    return (w1_m.astype(jnp.bfloat16), g1_m, b1_m,
            wh_m.astype(jnp.bfloat16), gh_m, bh_m)


def _im2col_nchw(x, k, stride, pad):
    """General NCHW -> (B*Ho*Wo, C*k*k), columns in (ci, kh, kw) order (fallback path)."""
    b, c, h, w = x.shape
    xp = jnp.pad(x, ((0, 0), (0, 0), (pad, pad), (pad, pad)))
    ho = (h + 2 * pad - k) // stride + 1
    wo = (w + 2 * pad - k) // stride + 1
    cols = []
    for oh in range(ho):
        for ow in range(wo):
            patch = xp[:, :, oh * stride:oh * stride + k, ow * stride:ow * stride + k]
            cols.append(patch.reshape(b, -1))
    patches = jnp.stack(cols, axis=1).reshape(b * ho * wo, c * k * k)
    return patches, ho, wo


@functools.partial(jax.jit, static_argnames=("dim_disc", "dim_cont"))
def qback_forward(img, w1_m, g1_m, b1_m, wh_m, gh_m, bh_m, *, dim_disc, dim_cont):
    b, _, h, w = img.shape
    if (h, w) == (2, 2):
        # k=4, s=2, p=1 on a 2x2 input: the single 4x4 patch IS the zero-padded image,
        # so im2col is just a pad + reshape (columns already in (ci, kh, kw) order).
        patches = jnp.pad(img, ((0, 0), (0, 0), (1, 1), (1, 1))).reshape(b, -1)
        ho = wo = 1
    else:
        # Note: for Ho*Wo > 1 the row ordering is (b, oh, ow); PyTorch's .squeeze() only
        # yields per-sample vectors when Ho = Wo = 1 (the Q-head's intended use).
        patches, ho, wo = _im2col_nchw(img, k=4, stride=2, pad=1)

    m = b * ho * wo
    kdim = patches.shape[1]
    m_pad = max(8, ((m + 7) // 8) * 8)   # full sublanes; extra rows are zero + masked

    patches_p = jnp.zeros((m_pad, kdim), jnp.bfloat16)
    patches_p = patches_p.at[:m].set(patches.astype(jnp.bfloat16))

    kernel = functools.partial(
        qback_kernel, m_real=m, dim_disc=dim_disc, dim_cont=dim_cont)

    out = pl.pallas_call(
        kernel,
        out_shape=jax.ShapeDtypeStruct((m_pad, N_PAD), jnp.float32),
        in_specs=[pl.BlockSpec(memory_space=pltpu.MemorySpace.VMEM)] * 7,
        out_specs=pl.BlockSpec(memory_space=pltpu.MemorySpace.VMEM),
    )(patches_p, w1_m, g1_m, b1_m, wh_m, gh_m, bh_m)

    logits = out[:m, :dim_disc]
    mu = out[:m, dim_disc:dim_disc + dim_cont]
    var = out[:m, dim_disc + dim_cont:dim_disc + 2 * dim_cont]
    # squeeze(): with Ho = Wo = 1 the rows are per-sample vectors, matching PyTorch.
    return logits, mu, var


def ref_forward(img, params):
    """Pure-JAX reference matching the PyTorch module (training-mode BN).

    Conv operands are quantized to bf16 (f32 accumulation) to mirror the kernel's
    bf16 MXU feeding; all other math stays f32.
    """
    w1, g1, b1, wd, gd, bd, wmu, wvar = params
    q = lambda a: a.astype(jnp.bfloat16)

    def bn(x, gamma, beta):
        mean = x.mean(axis=(0, 2, 3), keepdims=True)
        var = ((x - mean) ** 2).mean(axis=(0, 2, 3), keepdims=True)
        xh = (x - mean) / jnp.sqrt(var + BN_EPS)
        return xh * gamma.reshape(1, -1, 1, 1) + beta.reshape(1, -1, 1, 1)

    def conv(x, w, stride, pad):
        return jax.lax.conv_general_dilated(
            q(x), q(w), window_strides=(stride, stride),
            padding=((pad, pad), (pad, pad)),
            dimension_numbers=("NCHW", "OIHW", "NCHW"),
            preferred_element_type=jnp.float32)

    x = _leaky_relu(bn(conv(img, w1, 2, 1), g1, b1))
    logits = _leaky_relu(bn(conv(x, wd, 1, 0), gd, bd))
    mu = conv(x, wmu, 1, 0)
    var = jnp.exp(conv(x, wvar, 1, 0))
    return logits.squeeze(), mu.squeeze(), var.squeeze()


def init_params(key, num_filters, dim_discrete, dim_cont):
    c_in, c_mid = num_filters * 4, num_filters * 2
    ks = jax.random.split(key, 6)
    # initialize_weights convention: conv ~ N(0, 0.02), BN gamma ~ N(1, 0.02), BN beta = 0.
    w1 = 0.02 * jax.random.normal(ks[0], (c_mid, c_in, 4, 4), jnp.float32)
    g1 = 1.0 + 0.02 * jax.random.normal(ks[1], (c_mid,), jnp.float32)
    b1 = jnp.zeros((c_mid,), jnp.float32)
    wd = 0.02 * jax.random.normal(ks[2], (dim_discrete, c_mid, 1, 1), jnp.float32)
    gd = 1.0 + 0.02 * jax.random.normal(ks[3], (dim_discrete,), jnp.float32)
    bd = jnp.zeros((dim_discrete,), jnp.float32)
    wmu = 0.02 * jax.random.normal(ks[4], (dim_cont, c_mid, 1, 1), jnp.float32)
    wvar = 0.02 * jax.random.normal(ks[5], (dim_cont, c_mid, 1, 1), jnp.float32)
    return (w1, g1, b1, wd, gd, bd, wmu, wvar)


if __name__ == "__main__":
    num_filters, dim_discrete, dim_cont = 8, 10, 2
    batch, spatial = 2, 2  # spatial=2 -> conv(k4,s2,p1) output is 1x1 -> squeeze to (B, dim)

    key = jax.random.PRNGKey(0)
    k_img, k_par = jax.random.split(key)
    img = jax.random.normal(k_img, (batch, num_filters * 4, spatial, spatial), jnp.float32)
    params = init_params(k_par, num_filters, dim_discrete, dim_cont)

    # One-time weight layout prep (outside the per-call hot path).
    w1_m, g1_m, b1_m, wh_m, gh_m, bh_m = prepare_params(params)

    logits, mu, var = qback_forward(img, w1_m, g1_m, b1_m, wh_m, gh_m, bh_m,
                                    dim_disc=dim_discrete, dim_cont=dim_cont)
    jax.block_until_ready((logits, mu, var))

    r_logits, r_mu, r_var = ref_forward(img, params)
    assert logits.shape == r_logits.shape == (batch, dim_discrete)
    assert mu.shape == r_mu.shape == (batch, dim_cont)
    assert jnp.allclose(logits, r_logits, atol=2e-3, rtol=2e-3)
    assert jnp.allclose(mu, r_mu, atol=2e-3, rtol=2e-3)
    assert jnp.allclose(var, r_var, atol=2e-3, rtol=2e-3)

    print("KERNEL_OK")
</pallas_src>

<mosaic_0001>
module attributes {stable_mosaic.version = 11 : i64} {
  func.func @qback_kernel(%arg0: memref<8x512xbf16, #tpu.memory_space<vmem>>, %arg1: memref<512x128xbf16, #tpu.memory_space<vmem>>, %arg2: memref<1x128xf32, #tpu.memory_space<vmem>>, %arg3: memref<1x128xf32, #tpu.memory_space<vmem>>, %arg4: memref<128x128xbf16, #tpu.memory_space<vmem>>, %arg5: memref<1x128xf32, #tpu.memory_space<vmem>>, %arg6: memref<1x128xf32, #tpu.memory_space<vmem>>, %arg7: memref<8x128xf32, #tpu.memory_space<vmem>>) attributes {dimension_semantics = [], scalar_prefetch = 0 : i64, scratch_operands = 0 : i64, tpu.core_type = #tpu.core_type<tc>} {
    %0 = tpu.iota {dimensions = array<i32: 0>} : vector<8x1xi32>
    %c2_i32 = arith.constant 2 : i32
    %1 = vector.broadcast %c2_i32 : i32 to vector<8x1xi32>
    %2 = arith.cmpi slt, %0, %1 : vector<8x1xi32>
    %3 = arith.extui %2 : vector<8x1xi1> to vector<8x1xi32>
    %4 = arith.sitofp %3 : vector<8x1xi32> to vector<8x1xf32>
    %c0 = arith.constant 0 : index
    %c0_0 = arith.constant 0 : index
    %5 = vector.load %arg0[%c0, %c0_0] : memref<8x512xbf16, #tpu.memory_space<vmem>>, vector<8x512xbf16>
    %c0_1 = arith.constant 0 : index
    %c0_2 = arith.constant 0 : index
    %6 = vector.load %arg1[%c0_1, %c0_2] : memref<512x128xbf16, #tpu.memory_space<vmem>>, vector<512x128xbf16>
    %cst = arith.constant dense<0.000000e+00> : vector<8x128xf32>
    %7 = tpu.matmul %5, %6, %cst {dimension_numbers = #tpu.dot_dimension_numbers<[1], [0], [0], [1], [0, 0, 1, 1], [], []>} : vector<8x512xbf16>, vector<512x128xbf16>, vector<8x128xf32> -> vector<8x128xf32>
    %c0_3 = arith.constant 0 : index
    %c0_4 = arith.constant 0 : index
    %8 = vector.load %arg2[%c0_3, %c0_4] : memref<1x128xf32, #tpu.memory_space<vmem>>, vector<1x128xf32>
    %c0_5 = arith.constant 0 : index
    %c0_6 = arith.constant 0 : index
    %9 = vector.load %arg3[%c0_5, %c0_6] : memref<1x128xf32, #tpu.memory_space<vmem>>, vector<1x128xf32>
    %10 = vector.broadcast %4 : vector<8x1xf32> to vector<8x128xf32>
    %11 = arith.mulf %7, %10 : vector<8x128xf32>
    %cst_7 = arith.constant dense<0.000000e+00> : vector<128xf32>
    %12 = vector.multi_reduction <add>, %11, %cst_7 [0] : vector<8x128xf32> to vector<128xf32>
    %13 = vector.shape_cast %12 : vector<128xf32> to vector<1x128xf32>
    %cst_8 = arith.constant 5.000000e-01 : f32
    %14 = vector.broadcast %cst_8 : f32 to vector<1x128xf32>
    %15 = arith.mulf %13, %14 : vector<1x128xf32>
    %16 = vector.broadcast %15 : vector<1x128xf32> to vector<8x128xf32>
    %17 = arith.subf %7, %16 : vector<8x128xf32>
    %18 = vector.broadcast %4 : vector<8x1xf32> to vector<8x128xf32>
    %19 = arith.mulf %17, %18 : vector<8x128xf32>
    %20 = arith.mulf %19, %19 : vector<8x128xf32>
    %cst_9 = arith.constant dense<0.000000e+00> : vector<128xf32>
    %21 = vector.multi_reduction <add>, %20, %cst_9 [0] : vector<8x128xf32> to vector<128xf32>
    %22 = vector.shape_cast %21 : vector<128xf32> to vector<1x128xf32>
    %cst_10 = arith.constant 5.000000e-01 : f32
    %23 = vector.broadcast %cst_10 : f32 to vector<1x128xf32>
    %24 = arith.mulf %22, %23 : vector<1x128xf32>
    %cst_11 = arith.constant 9.99999974E-6 : f32
    %25 = vector.broadcast %cst_11 : f32 to vector<1x128xf32>
    %26 = arith.addf %24, %25 : vector<1x128xf32>
    %27 = math.rsqrt %26 : vector<1x128xf32>
    %28 = arith.mulf %8, %27 : vector<1x128xf32>
    %29 = arith.mulf %15, %28 : vector<1x128xf32>
    %30 = arith.subf %9, %29 : vector<1x128xf32>
    %31 = vector.broadcast %28 : vector<1x128xf32> to vector<8x128xf32>
    %32 = arith.mulf %7, %31 : vector<8x128xf32>
    %33 = vector.broadcast %30 : vector<1x128xf32> to vector<8x128xf32>
    %34 = arith.addf %32, %33 : vector<8x128xf32>
    %cst_12 = arith.constant 0.000000e+00 : f32
    %35 = vector.broadcast %cst_12 : f32 to vector<8x128xf32>
    %36 = arith.cmpf oge, %34, %35 : vector<8x128xf32>
    %cst_13 = arith.constant 2.000000e-01 : f32
    %37 = vector.broadcast %cst_13 : f32 to vector<8x128xf32>
    %38 = arith.mulf %37, %34 : vector<8x128xf32>
    %39 = arith.select %36, %34, %38 : vector<8x128xi1>, vector<8x128xf32>
    %40 = vector.broadcast %4 : vector<8x1xf32> to vector<8x128xf32>
    %41 = arith.mulf %39, %40 : vector<8x128xf32>
    %42 = arith.truncf %41 : vector<8x128xf32> to vector<8x128xbf16>
    %c0_14 = arith.constant 0 : index
    %c0_15 = arith.constant 0 : index
    %43 = vector.load %arg4[%c0_14, %c0_15] : memref<128x128xbf16, #tpu.memory_space<vmem>>, vector<128x128xbf16>
    %cst_16 = arith.constant dense<0.000000e+00> : vector<8x128xf32>
    %44 = tpu.matmul %42, %43, %cst_16 {dimension_numbers = #tpu.dot_dimension_numbers<[1], [0], [0], [1], [0, 0, 1, 1], [], []>} : vector<8x128xbf16>, vector<128x128xbf16>, vector<8x128xf32> -> vector<8x128xf32>
    %c0_17 = arith.constant 0 : index
    %c0_18 = arith.constant 0 : index
    %45 = vector.load %arg5[%c0_17, %c0_18] : memref<1x128xf32, #tpu.memory_space<vmem>>, vector<1x128xf32>
    %c0_19 = arith.constant 0 : index
    %c0_20 = arith.constant 0 : index
    %46 = vector.load %arg6[%c0_19, %c0_20] : memref<1x128xf32, #tpu.memory_space<vmem>>, vector<1x128xf32>
    %47 = vector.broadcast %4 : vector<8x1xf32> to vector<8x128xf32>
    %48 = arith.mulf %44, %47 : vector<8x128xf32>
    %cst_21 = arith.constant dense<0.000000e+00> : vector<128xf32>
    %49 = vector.multi_reduction <add>, %48, %cst_21 [0] : vector<8x128xf32> to vector<128xf32>
    %50 = vector.shape_cast %49 : vector<128xf32> to vector<1x128xf32>
    %cst_22 = arith.constant 5.000000e-01 : f32
    %51 = vector.broadcast %cst_22 : f32 to vector<1x128xf32>
    %52 = arith.mulf %50, %51 : vector<1x128xf32>
    %53 = vector.broadcast %52 : vector<1x128xf32> to vector<8x128xf32>
    %54 = arith.subf %44, %53 : vector<8x128xf32>
    %55 = vector.broadcast %4 : vector<8x1xf32> to vector<8x128xf32>
    %56 = arith.mulf %54, %55 : vector<8x128xf32>
    %57 = arith.mulf %56, %56 : vector<8x128xf32>
    %cst_23 = arith.constant dense<0.000000e+00> : vector<128xf32>
    %58 = vector.multi_reduction <add>, %57, %cst_23 [0] : vector<8x128xf32> to vector<128xf32>
    %59 = vector.shape_cast %58 : vector<128xf32> to vector<1x128xf32>
    %cst_24 = arith.constant 5.000000e-01 : f32
    %60 = vector.broadcast %cst_24 : f32 to vector<1x128xf32>
    %61 = arith.mulf %59, %60 : vector<1x128xf32>
    %cst_25 = arith.constant 9.99999974E-6 : f32
    %62 = vector.broadcast %cst_25 : f32 to vector<1x128xf32>
    %63 = arith.addf %61, %62 : vector<1x128xf32>
    %64 = math.rsqrt %63 : vector<1x128xf32>
    %65 = arith.mulf %45, %64 : vector<1x128xf32>
    %66 = arith.mulf %52, %65 : vector<1x128xf32>
    %67 = arith.subf %46, %66 : vector<1x128xf32>
    %68 = vector.broadcast %65 : vector<1x128xf32> to vector<8x128xf32>
    %69 = arith.mulf %44, %68 : vector<8x128xf32>
    %70 = vector.broadcast %67 : vector<1x128xf32> to vector<8x128xf32>
    %71 = arith.addf %69, %70 : vector<8x128xf32>
    %cst_26 = arith.constant 0.000000e+00 : f32
    %72 = vector.broadcast %cst_26 : f32 to vector<8x128xf32>
    %73 = arith.cmpf oge, %71, %72 : vector<8x128xf32>
    %cst_27 = arith.constant 2.000000e-01 : f32
    %74 = vector.broadcast %cst_27 : f32 to vector<8x128xf32>
    %75 = arith.mulf %74, %71 : vector<8x128xf32>
    %76 = arith.select %73, %71, %75 : vector<8x128xi1>, vector<8x128xf32>
    %77 = tpu.iota {dimensions = array<i32: 1>} : vector<1x128xi32>
    %c10_i32 = arith.constant 10 : i32
    %78 = vector.broadcast %c10_i32 : i32 to vector<1x128xi32>
    %79 = arith.cmpi slt, %77, %78 : vector<1x128xi32>
    %c10_i32_28 = arith.constant 10 : i32
    %80 = vector.broadcast %c10_i32_28 : i32 to vector<1x128xi32>
    %81 = arith.cmpi sge, %77, %80 : vector<1x128xi32>
    %c12_i32 = arith.constant 12 : i32
    %82 = vector.broadcast %c12_i32 : i32 to vector<1x128xi32>
    %83 = arith.cmpi slt, %77, %82 : vector<1x128xi32>
    %84 = arith.andi %81, %83 : vector<1x128xi1>
    %85 = math.exp %44 : vector<8x128xf32>
    %86 = vector.shape_cast %84 : vector<1x128xi1> to vector<1x128xi1>
    %87 = vector.broadcast %86 : vector<1x128xi1> to vector<8x128xi1>
    %88 = arith.select %87, %44, %85 : vector<8x128xi1>, vector<8x128xf32>
    %89 = vector.shape_cast %79 : vector<1x128xi1> to vector<1x128xi1>
    %90 = vector.broadcast %89 : vector<1x128xi1> to vector<8x128xi1>
    %91 = arith.select %90, %76, %88 : vector<8x128xi1>, vector<8x128xf32>
    %c0_29 = arith.constant 0 : index
    %c0_30 = arith.constant 0 : index
    %92 = vector.load %arg7[%c0_29, %c0_30] : memref<8x128xf32, #tpu.memory_space<vmem>>, vector<8x128xf32>
    tpu.vector_store %arg7[%c0_29, %c0_30], %91 {strides = array<i32>} : memref<8x128xf32, #tpu.memory_space<vmem>>, vector<8x128xf32>,
    return
  }
}

</mosaic_0001>

<llo_original>
// kernel: qback_forward.1
$region0: #{qback_forward.1}
  #allocation0 [shape = 'u32[]', space=smem, size = 0x4, offset = 0x4, fixed_abs, tag = 'smem constant byte address 0x4 - core index']
  #allocation1 [shape = 'u32[144,128]{1,0:T(1,128)}', space=vmem, size = 0x12000, scoped, tag = 'internal scratch']
  %s0 = inlined_call_operand.vmem [shape: bf16[8,512], index: 0, kind: input, shape index: {}]
  %s1 = inlined_call_operand.vmem [shape: bf16[512,128], index: 1, kind: input, shape index: {}]
  %s2 = inlined_call_operand.vmem [shape: f32[1,128], index: 2, kind: input, shape index: {}]
  %s3 = inlined_call_operand.vmem [shape: f32[1,128], index: 3, kind: input, shape index: {}]
  %s4 = inlined_call_operand.vmem [shape: bf16[128,128], index: 4, kind: input, shape index: {}]
  %s5 = inlined_call_operand.vmem [shape: f32[1,128], index: 5, kind: input, shape index: {}]
  %s6 = inlined_call_operand.vmem [shape: f32[1,128], index: 6, kind: input, shape index: {}]
  %s7 = inlined_call_operand.vmem [shape: f32[8,128], index: 7, kind: output, shape index: {}]
  %s8 = sld [smem:[#allocation0]]
  $region38: #{qback_forward.1} parent=0
    _
  %s10 = ssub.s32 1, %s8
  %s11 = scalar_select 0, %s10, %s8
  // Predicated region
  $region2: #{qback_forward.1} parent=0 // pred_check
    _
  $region3: #{qback_forward.1} parent=0 // pred_check_branch
    %13 = sbr.rel (0) target = $region5
  $region4: #{qback_forward.1} parent=0 // pred_region
    _
  $region5: #{qback_forward.1} parent=0 // pred_fallthru
    _
  // Predicated region
  $region6: #{qback_forward.1} parent=0 // pred_check
    _
  $region7: #{qback_forward.1} parent=0 // pred_check_branch
    %15 = sbr.rel (0) target = $region9
  $region8: #{qback_forward.1} parent=0 // pred_region
    _
  $region9: #{qback_forward.1} parent=0 // pred_fallthru
    _
  // Predicated region
  $region10: #{qback_forward.1} parent=0 // pred_check
    _
  $region11: #{qback_forward.1} parent=0 // pred_check_branch
    %17 = sbr.rel (0) target = $region13
  $region12: #{qback_forward.1} parent=0 // pred_region
    _
  $region13: #{qback_forward.1} parent=0 // pred_fallthru
    _
  // Predicated region
  $region14: #{qback_forward.1} parent=0 // pred_check
    _
  $region15: #{qback_forward.1} parent=0 // pred_check_branch
    %19 = sbr.rel (0) target = $region17
  $region16: #{qback_forward.1} parent=0 // pred_region
    _
  $region17: #{qback_forward.1} parent=0 // pred_fallthru
    _
  // Predicated region
  $region18: #{qback_forward.1} parent=0 // pred_check
    _
  $region19: #{qback_forward.1} parent=0 // pred_check_branch
    %21 = sbr.rel (0) target = $region21
  $region20: #{qback_forward.1} parent=0 // pred_region
    _
  $region21: #{qback_forward.1} parent=0 // pred_fallthru
    _
  // Predicated region
  $region22: #{qback_forward.1} parent=0 // pred_check
    _
  $region23: #{qback_forward.1} parent=0 // pred_check_branch
    %23 = sbr.rel (0) target = $region25
  $region24: #{qback_forward.1} parent=0 // pred_region
    _
  $region25: #{qback_forward.1} parent=0 // pred_fallthru
    _
  // Predicated region
  $region26: #{qback_forward.1} parent=0 // pred_check
    _
  $region27: #{qback_forward.1} parent=0 // pred_check_branch
    %25 = sbr.rel (0) target = $region29
  $region28: #{qback_forward.1} parent=0 // pred_region
    _
  $region29: #{qback_forward.1} parent=0 // pred_fallthru
    _
  %v27 = vlaneseq
  %v28 = vshrl.u32 %v27, 7
  %vm29 = vcmp.lt.s32.totalorder %v28, 2
  %v30 = vsel %vm29, 1, 0
  %v31 = vcvt.s32.f32 %v30
  %v32 = vld [vmem:[%s0] sm:$0xff]
  %v33 = vld [vmem:[%s0 + $0x8] sm:$0xff]
  %v34 = vld [vmem:[%s1] sm:$0xf]
  %v35 = vld [vmem:[%s1 + $0x4] sm:$0xf]
  %v36 = vld [vmem:[%s1 + $0x8] sm:$0xf]
  %v37 = vld [vmem:[%s1 + $0xc] sm:$0xf]
  %v38 = vld [vmem:[%s1 + $0x10] sm:$0xf]
  %v39 = vld [vmem:[%s1 + $0x14] sm:$0xf]
  %v40 = vld [vmem:[%s1 + $0x18] sm:$0xf]
  %v41 = vld [vmem:[%s1 + $0x1c] sm:$0xf]
  %v42 = vld [vmem:[%s1 + $0x20] sm:$0xf]
  %v43 = vld [vmem:[%s1 + $0x24] sm:$0xf]
  %v44 = vld [vmem:[%s1 + $0x28] sm:$0xf]
  %v45 = vld [vmem:[%s1 + $0x2c] sm:$0xf]
  %v46 = vld [vmem:[%s1 + $0x30] sm:$0xf]
  %v47 = vld [vmem:[%s1 + $0x34] sm:$0xf]
  %v48 = vld [vmem:[%s1 + $0x38] sm:$0xf]
  %v49 = vld [vmem:[%s1 + $0x3c] sm:$0xf]
  %v50 = vld [vmem:[%s1 + $0x40] sm:$0xf]
  %v51 = vld [vmem:[%s1 + $0x44] sm:$0xf]
  %v52 = vld [vmem:[%s1 + $0x48] sm:$0xf]
  %v53 = vld [vmem:[%s1 + $0x4c] sm:$0xf]
  %v54 = vld [vmem:[%s1 + $0x50] sm:$0xf]
  %v55 = vld [vmem:[%s1 + $0x54] sm:$0xf]
  %v56 = vld [vmem:[%s1 + $0x58] sm:$0xf]
  %v57 = vld [vmem:[%s1 + $0x5c] sm:$0xf]
  %v58 = vld [vmem:[%s1 + $0x60] sm:$0xf]
  %v59 = vld [vmem:[%s1 + $0x64] sm:$0xf]
  %v60 = vld [vmem:[%s1 + $0x68] sm:$0xf]
  %v61 = vld [vmem:[%s1 + $0x6c] sm:$0xf]
  %v62 = vld [vmem:[%s1 + $0x70] sm:$0xf]
  %v63 = vld [vmem:[%s1 + $0x74] sm:$0xf]
  %v64 = vld [vmem:[%s1 + $0x78] sm:$0xf]
  %v65 = vld [vmem:[%s1 + $0x7c] sm:$0xf]
  %v66 = vld [vmem:[%s1 + $0x80] sm:$0xf]
  %v67 = vld [vmem:[%s1 + $0x84] sm:$0xf]
  %v68 = vld [vmem:[%s1 + $0x88] sm:$0xf]
  %v69 = vld [vmem:[%s1 + $0x8c] sm:$0xf]
  %v70 = vld [vmem:[%s1 + $0x90] sm:$0xf]
  %v71 = vld [vmem:[%s1 + $0x94] sm:$0xf]
  %v72 = vld [vmem:[%s1 + $0x98] sm:$0xf]
  %v73 = vld [vmem:[%s1 + $0x9c] sm:$0xf]
  %v74 = vld [vmem:[%s1 + $0xa0] sm:$0xf]
  %v75 = vld [vmem:[%s1 + $0xa4] sm:$0xf]
  %v76 = vld [vmem:[%s1 + $0xa8] sm:$0xf]
  %v77 = vld [vmem:[%s1 + $0xac] sm:$0xf]
  %v78 = vld [vmem:[%s1 + $0xb0] sm:$0xf]
  %v79 = vld [vmem:[%s1 + $0xb4] sm:$0xf]
  %v80 = vld [vmem:[%s1 + $0xb8] sm:$0xf]
  %v81 = vld [vmem:[%s1 + $0xbc] sm:$0xf]
  %v82 = vld [vmem:[%s1 + $0xc0] sm:$0xf]
  %v83 = vld [vmem:[%s1 + $0xc4] sm:$0xf]
  %v84 = vld [vmem:[%s1 + $0xc8] sm:$0xf]
  %v85 = vld [vmem:[%s1 + $0xcc] sm:$0xf]
  %v86 = vld [vmem:[%s1 + $0xd0] sm:$0xf]
  %v87 = vld [vmem:[%s1 + $0xd4] sm:$0xf]
  %v88 = vld [vmem:[%s1 + $0xd8] sm:$0xf]
  %v89 = vld [vmem:[%s1 + $0xdc] sm:$0xf]
  %v90 = vld [vmem:[%s1 + $0xe0] sm:$0xf]
  %v91 = vld [vmem:[%s1 + $0xe4] sm:$0xf]
  %v92 = vld [vmem:[%s1 + $0xe8] sm:$0xf]
  %v93 = vld [vmem:[%s1 + $0xec] sm:$0xf]
  %v94 = vld [vmem:[%s1 + $0xf0] sm:$0xf]
  %v95 = vld [vmem:[%s1 + $0xf4] sm:$0xf]
  %v96 = vld [vmem:[%s1 + $0xf8] sm:$0xf]
  %v97 = vld [vmem:[%s1 + $0xfc] sm:$0xf]
  %v100 = vunpack.c.l.b16 %v32
  %v101 = vunpack.c.h.b16 %v32
  %v102 = vunpack.c.l.b16 %v33
  %v103 = vunpack.c.h.b16 %v33
  %v104 = vpack.c.b16 %v100, %v100
  %v105 = vpack.c.b16 %v101, %v101
  %v106 = vpack.c.b16 %v102, %v102
  %v107 = vpack.c.b16 %v103, %v103
  %v176 = vunpack.c.l.b16 %v34
  %v177 = vunpack.c.l.b16 %v35
  %v178 = vunpack.c.l.b16 %v36
  %v179 = vunpack.c.l.b16 %v37
  %v180 = vunpack.c.l.b16 %v38
  %v181 = vunpack.c.l.b16 %v39
  %v182 = vunpack.c.l.b16 %v40
  %v183 = vunpack.c.l.b16 %v41
  %v184 = vunpack.c.l.b16 %v42
  %v185 = vunpack.c.l.b16 %v43
  %v186 = vunpack.c.l.b16 %v44
  %v187 = vunpack.c.l.b16 %v45
  %v188 = vunpack.c.l.b16 %v46
  %v189 = vunpack.c.l.b16 %v47
  %v190 = vunpack.c.l.b16 %v48
  %v191 = vunpack.c.l.b16 %v49
  %v192 = vunpack.c.l.b16 %v50
  %v193 = vunpack.c.l.b16 %v51
  %v194 = vunpack.c.l.b16 %v52
  %v195 = vunpack.c.l.b16 %v53
  %v196 = vunpack.c.l.b16 %v54
  %v197 = vunpack.c.l.b16 %v55
  %v198 = vunpack.c.l.b16 %v56
  %v199 = vunpack.c.l.b16 %v57
  %v200 = vunpack.c.l.b16 %v58
  %v201 = vunpack.c.l.b16 %v59
  %v202 = vunpack.c.l.b16 %v60
  %v203 = vunpack.c.l.b16 %v61
  %v204 = vunpack.c.l.b16 %v62
  %v205 = vunpack.c.l.b16 %v63
  %v206 = vunpack.c.l.b16 %v64
  %v207 = vunpack.c.l.b16 %v65
  %v208 = vunpack.c.l.b16 %v66
  %v209 = vunpack.c.l.b16 %v67
  %v210 = vunpack.c.l.b16 %v68
  %v211 = vunpack.c.l.b16 %v69
  %v212 = vunpack.c.l.b16 %v70
  %v213 = vunpack.c.l.b16 %v71
  %v214 = vunpack.c.l.b16 %v72
  %v215 = vunpack.c.l.b16 %v73
  %v216 = vunpack.c.l.b16 %v74
  %v217 = vunpack.c.l.b16 %v75
  %v218 = vunpack.c.l.b16 %v76
  %v219 = vunpack.c.l.b16 %v77
  %v220 = vunpack.c.l.b16 %v78
  %v221 = vunpack.c.l.b16 %v79
  %v222 = vunpack.c.l.b16 %v80
  %v223 = vunpack.c.l.b16 %v81
  %v224 = vunpack.c.l.b16 %v82
  %v225 = vunpack.c.l.b16 %v83
  %v226 = vunpack.c.l.b16 %v84
  %v227 = vunpack.c.l.b16 %v85
  %v228 = vunpack.c.l.b16 %v86
  %v229 = vunpack.c.l.b16 %v87
  %v230 = vunpack.c.l.b16 %v88
  %v231 = vunpack.c.l.b16 %v89
  %v232 = vunpack.c.l.b16 %v90
  %v233 = vunpack.c.l.b16 %v91
  %v234 = vunpack.c.l.b16 %v92
  %v235 = vunpack.c.l.b16 %v93
  %v236 = vunpack.c.l.b16 %v94
  %v237 = vunpack.c.l.b16 %v95
  %v238 = vunpack.c.l.b16 %v96
  %v239 = vunpack.c.l.b16 %v97
  %v240 = vpack.c.b16 %v177, %v176
  %v241 = vpack.c.b16 %v179, %v178
  %v242 = vpack.c.b16 %v181, %v180
  %v243 = vpack.c.b16 %v183, %v182
  %v244 = vpack.c.b16 %v185, %v184
  %v245 = vpack.c.b16 %v187, %v186
  %v246 = vpack.c.b16 %v189, %v188
  %v247 = vpack.c.b16 %v191, %v190
  %v248 = vpack.c.b16 %v193, %v192
  %v249 = vpack.c.b16 %v195, %v194
  %v250 = vpack.c.b16 %v197, %v196
  %v251 = vpack.c.b16 %v199, %v198
  %v252 = vpack.c.b16 %v201, %v200
  %v253 = vpack.c.b16 %v203, %v202
  %v254 = vpack.c.b16 %v205, %v204
  %v255 = vpack.c.b16 %v207, %v206
  %v256 = vpack.c.b16 %v209, %v208
  %v257 = vpack.c.b16 %v211, %v210
  %v258 = vpack.c.b16 %v213, %v212
  %v259 = vpack.c.b16 %v215, %v214
  %v260 = vpack.c.b16 %v217, %v216
  %v261 = vpack.c.b16 %v219, %v218
  %v262 = vpack.c.b16 %v221, %v220
  %v263 = vpack.c.b16 %v223, %v222
  %v264 = vpack.c.b16 %v225, %v224
  %v265 = vpack.c.b16 %v227, %v226
  %v266 = vpack.c.b16 %v229, %v228
  %v267 = vpack.c.b16 %v231, %v230
  %v268 = vpack.c.b16 %v233, %v232
  %v269 = vpack.c.b16 %v235, %v234
  %v270 = vpack.c.b16 %v237, %v236
  %v271 = vpack.c.b16 %v239, %v238
  %304 = vmatprep.subr.bf16.mxu0 0
  %305 = vmatpush1.bf16.msra.mxu0 %v247
  %306 = vmatprep.subr.bf16.mxu0 0
  %307 = vmatpush1.bf16.msra.mxu0 %v246
  %308 = vmatprep.subr.bf16.mxu0 0
  %309 = vmatpush1.bf16.msra.mxu0 %v245
  %310 = vmatprep.subr.bf16.mxu0 0
  %311 = vmatpush1.bf16.msra.mxu0 %v244
  %312 = vmatprep.subr.bf16.mxu0 0
  %313 = vmatpush1.bf16.msra.mxu0 %v243
  %314 = vmatprep.subr.bf16.mxu0 0
  %315 = vmatpush1.bf16.msra.mxu0 %v242
  %316 = vmatprep.subr.bf16.mxu0 0
  %317 = vmatpush1.bf16.msra.mxu0 %v241
  %318 = vmatprep.subr.bf16.mxu0 0
  %319 = vmatpush1.bf16.msra.mxu0 %v240
  %320 = vmatprep.subr.bf16.mxu0 0
  %321 = vmatpush2.bf16.msra.mxu0 %v255
  %322 = vmatprep.subr.bf16.mxu0 0
  %323 = vmatpush2.bf16.msra.mxu0 %v254
  %324 = vmatprep.subr.bf16.mxu0 0
  %325 = vmatpush2.bf16.msra.mxu0 %v253
  %326 = vmatprep.subr.bf16.mxu0 0
  %327 = vmatpush2.bf16.msra.mxu0 %v252
  %328 = vmatprep.subr.bf16.mxu0 0
  %329 = vmatpush2.bf16.msra.mxu0 %v251
  %330 = vmatprep.subr.bf16.mxu0 0
  %331 = vmatpush2.bf16.msra.mxu0 %v250
  %332 = vmatprep.subr.bf16.mxu0 0
  %333 = vmatpush2.bf16.msra.mxu0 %v249
  %334 = vmatprep.subr.bf16.mxu0 0
  %335 = vmatpush2.bf16.msra.mxu0 %v248
  %336 = vmatprep.mubr.bf16.mxu0 %v105
  %337 = vmatmul.mubr.bf16.gmra.mxu0 %v104
  %v338 = vpop.f32.mrf.mxu0
  %v339 = vadd.f32 0.0, %v338
  %v340 = vpop.f32.mrf.mxu0
  %v341 = vpop.f32.mrf.mxu0
  %v342 = vpop.f32.mrf.mxu0
  %343 = vdwg.mxu0
  %344 = vmatprep.subr.bf16.mxu0 0
  %345 = vmatpush1.bf16.msra.mxu0 %v263
  %346 = vmatprep.subr.bf16.mxu0 0
  %347 = vmatpush1.bf16.msra.mxu0 %v262
  %348 = vmatprep.subr.bf16.mxu0 0
  %349 = vmatpush1.bf16.msra.mxu0 %v261
  %350 = vmatprep.subr.bf16.mxu0 0
  %351 = vmatpush1.bf16.msra.mxu0 %v260
  %352 = vmatprep.subr.bf16.mxu0 0
  %353 = vmatpush1.bf16.msra.mxu0 %v259
  %354 = vmatprep.subr.bf16.mxu0 0
  %355 = vmatpush1.bf16.msra.mxu0 %v258
  %356 = vmatprep.subr.bf16.mxu0 0
  %357 = vmatpush1.bf16.msra.mxu0 %v257
  %358 = vmatprep.subr.bf16.mxu0 0
  %359 = vmatpush1.bf16.msra.mxu0 %v256
  %360 = vmatprep.subr.bf16.mxu0 0
  %361 = vmatpush2.bf16.msra.mxu0 %v271
  %362 = vmatprep.subr.bf16.mxu0 0
  %363 = vmatpush2.bf16.msra.mxu0 %v270
  %364 = vmatprep.subr.bf16.mxu0 0
  %365 = vmatpush2.bf16.msra.mxu0 %v269
  %366 = vmatprep.subr.bf16.mxu0 0
  %367 = vmatpush2.bf16.msra.mxu0 %v268
  %368 = vmatprep.subr.bf16.mxu0 0
  %369 = vmatpush2.bf16.msra.mxu0 %v267
  %370 = vmatprep.subr.bf16.mxu0 0
  %371 = vmatpush2.bf16.msra.mxu0 %v266
  %372 = vmatprep.subr.bf16.mxu0 0
  %373 = vmatpush2.bf16.msra.mxu0 %v265
  %374 = vmatprep.subr.bf16.mxu0 0
  %375 = vmatpush2.bf16.msra.mxu0 %v264
  %376 = vmatprep.mubr.bf16.mxu0 %v107
  %377 = vmatmul.mubr.bf16.gmra.mxu0 %v106
  %v378 = vpop.f32.mrf.mxu0
  %v379 = vadd.f32 %v339, %v378
  %v380 = vpop.f32.mrf.mxu0
  %v381 = vpop.f32.mrf.mxu0
  %v382 = vpop.f32.mrf.mxu0
  %383 = vdwg.mxu0
  %v384 = vld [vmem:[%s2] sm:$0x1]
  %v385 = vld [vmem:[%s3] sm:$0x1]
  %v386 = vmul.f32 %v379, %v31
  %v387 = vrot.slane %v386, 4
  %v388 = vadd.f32 %v386, %v387
  %v389 = vrot.slane %v388, 2
  %v390 = vadd.f32 %v388, %v389
  %v391 = vrot.slane %v390, 1
  %v392 = vadd.f32 %v390, %v391
  %v393 = vmul.f32 %v392, 0.5
  %v394 = vsub.f32 %v379, %v393
  %v395 = vmul.f32 %v394, %v31
  %v396 = vmul.f32 %v395, %v395
  %v397 = vrot.slane %v396, 4
  %v398 = vadd.f32 %v396, %v397
  %v399 = vrot.slane %v398, 2
  %v400 = vadd.f32 %v398, %v399
  %v401 = vrot.slane %v400, 1
  %v402 = vadd.f32 %v400, %v401
  %v403 = vmul.f32 %v402, 0.5
  %v404 = vadd.f32 %v403, 1e-05
  %v405 = vrsqrt.pop %v404
  %v406 = vmul.f32 %v384, %v405
  %v407 = vmul.f32 %v393, %v406
  %v408 = vsub.f32 %v385, %v407
  %v410 = vlaneseq
  %v411 = vshrl.u32 %v410, 7
  %v412 = vsub.s32 0, %v411
  %v413 = vrot.slane %v406, %v412
  %v415 = vmul.f32 %v379, %v413
  %v417 = vlaneseq
  %v418 = vshrl.u32 %v417, 7
  %v419 = vsub.s32 0, %v418
  %v420 = vrot.slane %v408, %v419
  %v422 = vadd.f32 %v415, %v420
  %vm423 = vcmp.ge.f32.partialorder %v422, 0.0
  %v424 = vmul.f32 %v422, 0.2
  %v425 = vsel %vm423, %v422, %v424
  %v426 = vmul.f32 %v425, %v31
  %v427 = vpack.c.bf16 %v426, %v426
  %v428 = vld [vmem:[%s4] sm:$0xf]
  %v429 = vld [vmem:[%s4 + $0x4] sm:$0xf]
  %v430 = vld [vmem:[%s4 + $0x8] sm:$0xf]
  %v431 = vld [vmem:[%s4 + $0xc] sm:$0xf]
  %v432 = vld [vmem:[%s4 + $0x10] sm:$0xf]
  %v433 = vld [vmem:[%s4 + $0x14] sm:$0xf]
  %v434 = vld [vmem:[%s4 + $0x18] sm:$0xf]
  %v435 = vld [vmem:[%s4 + $0x1c] sm:$0xf]
  %v436 = vld [vmem:[%s4 + $0x20] sm:$0xf]
  %v437 = vld [vmem:[%s4 + $0x24] sm:$0xf]
  %v438 = vld [vmem:[%s4 + $0x28] sm:$0xf]
  %v439 = vld [vmem:[%s4 + $0x2c] sm:$0xf]
  %v440 = vld [vmem:[%s4 + $0x30] sm:$0xf]
  %v441 = vld [vmem:[%s4 + $0x34] sm:$0xf]
  %v442 = vld [vmem:[%s4 + $0x38] sm:$0xf]
  %v443 = vld [vmem:[%s4 + $0x3c] sm:$0xf]
  %v460 = vunpack.c.l.b16 %v428
  %v461 = vunpack.c.l.b16 %v429
  %v462 = vunpack.c.l.b16 %v430
  %v463 = vunpack.c.l.b16 %v431
  %v464 = vunpack.c.l.b16 %v432
  %v465 = vunpack.c.l.b16 %v433
  %v466 = vunpack.c.l.b16 %v434
  %v467 = vunpack.c.l.b16 %v435
  %v468 = vunpack.c.l.b16 %v436
  %v469 = vunpack.c.l.b16 %v437
  %v470 = vunpack.c.l.b16 %v438
  %v471 = vunpack.c.l.b16 %v439
  %v472 = vunpack.c.l.b16 %v440
  %v473 = vunpack.c.l.b16 %v441
  %v474 = vunpack.c.l.b16 %v442
  %v475 = vunpack.c.l.b16 %v443
  %v476 = vpack.c.b16 %v461, %v460
  %v477 = vpack.c.b16 %v463, %v462
  %v478 = vpack.c.b16 %v465, %v464
  %v479 = vpack.c.b16 %v467, %v466
  %v480 = vpack.c.b16 %v469, %v468
  %v481 = vpack.c.b16 %v471, %v470
  %v482 = vpack.c.b16 %v473, %v472
  %v483 = vpack.c.b16 %v475, %v474
  %492 = vmatprep.subr.bf16.mxu0 0
  %493 = vmatpush1.bf16.msra.mxu0 %v483
  %494 = vmatprep.subr.bf16.mxu0 0
  %495 = vmatpush1.bf16.msra.mxu0 %v482
  %496 = vmatprep.subr.bf16.mxu0 0
  %497 = vmatpush1.bf16.msra.mxu0 %v481
  %498 = vmatprep.subr.bf16.mxu0 0
  %499 = vmatpush1.bf16.msra.mxu0 %v480
  %500 = vmatprep.subr.bf16.mxu0 0
  %501 = vmatpush1.bf16.msra.mxu0 %v479
  %502 = vmatprep.subr.bf16.mxu0 0
  %503 = vmatpush1.bf16.msra.mxu0 %v478
  %504 = vmatprep.subr.bf16.mxu0 0
  %505 = vmatpush1.bf16.msra.mxu0 %v477
  %506 = vmatprep.subr.bf16.mxu0 0
  %507 = vmatpush1.bf16.msra.mxu0 %v476
  %508 = vmatprep.subr.bf16.mxu0 0
  %509 = vmatpush2.bf16.msra.mxu0 0
  %510 = vmatprep.subr.bf16.mxu0 0
  %511 = vmatpush2.bf16.msra.mxu0 0
  %512 = vmatprep.subr.bf16.mxu0 0
  %513 = vmatpush2.bf16.msra.mxu0 0
  %514 = vmatprep.subr.bf16.mxu0 0
  %515 = vmatpush2.bf16.msra.mxu0 0
  %516 = vmatprep.subr.bf16.mxu0 0
  %517 = vmatpush2.bf16.msra.mxu0 0
  %518 = vmatprep.subr.bf16.mxu0 0
  %519 = vmatpush2.bf16.msra.mxu0 0
  %520 = vmatprep.subr.bf16.mxu0 0
  %521 = vmatpush2.bf16.msra.mxu0 0
  %522 = vmatprep.subr.bf16.mxu0 0
  %523 = vmatpush2.bf16.msra.mxu0 0
  %524 = vmatprep.mubr.bf16.mxu0 0
  %525 = vmatmul.mubr.bf16.gmra.mxu0 %v427
  %v526 = vpop.f32.mrf.mxu0
  %v527 = vadd.f32 0.0, %v526
  %v528 = vpop.f32.mrf.mxu0
  %v529 = vpop.f32.mrf.mxu0
  %v530 = vpop.f32.mrf.mxu0
  %531 = vdwg.mxu0
  %v532 = vld [vmem:[%s5] sm:$0x1]
  %v533 = vld [vmem:[%s6] sm:$0x1]
  %v534 = vmul.f32 %v527, %v31
  %v535 = vrot.slane %v534, 4
  %v536 = vadd.f32 %v534, %v535
  %v537 = vrot.slane %v536, 2
  %v538 = vadd.f32 %v536, %v537
  %v539 = vrot.slane %v538, 1
  %v540 = vadd.f32 %v538, %v539
  %v541 = vmul.f32 %v540, 0.5
  %v542 = vsub.f32 %v527, %v541
  %v543 = vmul.f32 %v542, %v31
  %v544 = vmul.f32 %v543, %v543
  %v545 = vrot.slane %v544, 4
  %v546 = vadd.f32 %v544, %v545
  %v547 = vrot.slane %v546, 2
  %v548 = vadd.f32 %v546, %v547
  %v549 = vrot.slane %v548, 1
  %v550 = vadd.f32 %v548, %v549
  %v551 = vmul.f32 %v550, 0.5
  %v552 = vadd.f32 %v551, 1e-05
  %v553 = vrsqrt.pop %v552
  %v554 = vmul.f32 %v532, %v553
  %v555 = vmul.f32 %v541, %v554
  %v556 = vsub.f32 %v533, %v555
  %v558 = vlaneseq
  %v559 = vshrl.u32 %v558, 7
  %v560 = vsub.s32 0, %v559
  %v561 = vrot.slane %v554, %v560
  %v563 = vmul.f32 %v527, %v561
  %v565 = vlaneseq
  %v566 = vshrl.u32 %v565, 7
  %v567 = vsub.s32 0, %v566
  %v568 = vrot.slane %v556, %v567
  %v570 = vadd.f32 %v563, %v568
  %vm571 = vcmp.ge.f32.partialorder %v570, 0.0
  %v572 = vmul.f32 %v570, 0.2
  %v573 = vsel %vm571, %v570, %v572
  %v574 = vlaneseq
  %v575 = vand.u32 %v574, 127
  %vm576 = vcmp.lt.s32.totalorder %v575, 10
  %vm577 = vcmp.ge.s32.totalorder %v575, 10
  %vm578 = vcmp.lt.s32.totalorder %v575, 12
  %vm579 = vmand %vm577, %vm578
  %v580 = vmul.f32 %v527, 1.442695
  %v581 = vpow.pop %v580
  %v582 = vsel %vm579, 1, 0
  %vm583 = vcmp.eq.s32.totalorder %v582, 1
  %v584 = vsel %vm583, %v527, %v581
  %v585 = vsel %vm576, 1, 0
  %vm586 = vcmp.eq.s32.totalorder %v585, 1
  %v587 = vsel %vm586, %v573, %v584
  %588 = vst [vmem:[%s7] sm:$0xff] %v587
  // Predicated region
  $region30: #{qback_forward.1} parent=0 // pred_check
    _
  $region31: #{qback_forward.1} parent=0 // pred_check_branch
    %590 = sbr.rel (0) target = $region33
  $region32: #{qback_forward.1} parent=0 // pred_region
    _
  $region33: #{qback_forward.1} parent=0 // pred_fallthru
    _
  // Predicated region
  $region34: #{qback_forward.1} parent=0 // pred_check
    _
  $region35: #{qback_forward.1} parent=0 // pred_check_branch
    %592 = sbr.rel (0) target = $region37
  $region36: #{qback_forward.1} parent=0 // pred_region
    _
  $region37: #{qback_forward.1} parent=0 // pred_fallthru
    _

</llo_original>
